<compile_context>
chip_gen: v5e
topology: v5e:2x2
jax: 0.10.0
libtpu: 0.0.40
codegen_flags: <defaults>
</compile_context>

<pallas_src>
import jax
import jax.numpy as jnp
import numpy as np
from jax.experimental import pallas as pl
from jax.experimental.pallas import tpu as pltpu


# ----------------------------- Pallas kernel --------------------------------
def qtran_v_kernel(x_ref, w1_ref, b1_ref, w2_ref, b2_ref,
                   w3_ref, b3_ref, w4_ref, b4_ref, o_ref):
    x = x_ref[...]                                                # (T, P*S)

    h = jnp.dot(x, w1_ref[...], preferred_element_type=jnp.float32) + b1_ref[...]
    h = jnp.maximum(h, 0.0)

    h = jnp.dot(h, w2_ref[...], preferred_element_type=jnp.float32) + b2_ref[...]
    h = jnp.maximum(h, 0.0)

    h = jnp.dot(h, w3_ref[...], preferred_element_type=jnp.float32) + b3_ref[...]
    h = jnp.maximum(h, 0.0)

    # Final layer against block-diagonal w4 of shape (P*H, P): stays packed,
    # no sublane<->lane relayout of the result.  b4 is an SMEM scalar.
    v = jnp.dot(h, w4_ref[...], preferred_element_type=jnp.float32) + b4_ref[0, 0]

    o_ref[...] = v.astype(o_ref.dtype)                            # (T, P)


def _round_up(n, m):
    return -(-n // m) * m


def qtran_v_forward(state, params, *, batch_tile=8192):
    """state: (B, state_shape) f32  ->  (B, 1) f32."""
    (w1, b1), (w2, b2), (w3, b3), (w4, b4) = params
    B, S = state.shape
    H = w1.shape[1]
    assert batch_tile % 128 == 0, "batch_tile must be a multiple of 128"

    # Lane-pack factor: P batch rows share one 128-lane row of the hidden
    # activations.  Fall back to a smaller P (down to 1) when B is not
    # divisible, so we never need a wrapper-side pad/copy of state in HBM.
    P = 128 // H if (H <= 128 and 128 % H == 0) else 1
    while P > 1 and B % P != 0:
        P //= 2

    if P > 1:
        x = state.reshape(B // P, P * S)               # free row-major view
        eye = jnp.eye(P, dtype=w1.dtype)
        # Block-diagonal weights (one-time, tiny): packed lane group j sees W.
        w1p, w2p, w3p = (jnp.kron(eye, w) for w in (w1, w2, w3))
        w4p = jnp.kron(eye, w4)                        # (P*H, P)
        b1p, b2p, b3p = (jnp.tile(b, (1, P)) for b in (b1, b2, b3))
    else:
        x, w1p, w2p, w3p, w4p = state, w1, w2, w3, w4
        b1p, b2p, b3p = b1, b2, b3

    Bp = B // P                                        # packed rows
    SP, HP = P * S, P * H

    # Packed rows per tile: large tiles amortize per-step overhead, but never
    # larger than the (8-aligned) packed batch so tiny batches get tiny tiles.
    T = min(batch_tile // P, _round_up(Bp, 8))
    T = max(8, _round_up(T, 8))
    num_tiles = pl.cdiv(Bp, T)

    # Whole-array blocks with constant index maps -> copied into VMEM once and
    # revisited across grid steps (no per-step re-DMA).
    const = lambda shape: pl.BlockSpec(shape, lambda i: (0, 0))

    out = pl.pallas_call(
        qtran_v_kernel,
        out_shape=jax.ShapeDtypeStruct((num_tiles * T, P), jnp.float32),
        grid=(num_tiles,),
        in_specs=[
            pl.BlockSpec((T, SP), lambda i: (i, 0)),   # packed state tile
            const((SP, HP)), const((1, HP)),           # layer 1
            const((HP, HP)), const((1, HP)),           # layer 2
            const((HP, HP)), const((1, HP)),           # layer 3
            const((HP, P)),                            # layer 4 (blockdiag w4)
            pl.BlockSpec(memory_space=pltpu.MemorySpace.SMEM),  # b4 scalar
        ],
        out_specs=pl.BlockSpec((T, P), lambda i: (i, 0)),
        compiler_params=pltpu.CompilerParams(
            dimension_semantics=("parallel",)),
    )(x, w1p, b1p, w2p, b2p, w3p, b3p, w4p, b4)

    # (num_tiles*T, P) row-major == per-original-row values; drop ragged tail.
    return out.reshape(num_tiles * T * P, 1)[:B]


# --------------------------- parameter initialization ------------------------
def fanin_init_weight(key, in_features, out_features):
    # PyTorch fanin_init uses weight.size(0) = out_features as "fan_in"
    # for 2-D tensors (nn.Linear weight is (out, in)). Reproduce that bound.
    bound = 1.0 / np.sqrt(out_features)
    # Stored transposed relative to torch: (in_features, out_features).
    return jax.random.uniform(key, (in_features, out_features),
                              minval=-bound, maxval=bound, dtype=jnp.float32)


def make_params(key, state_shape, hidden_dim, b_init_value=0.01):
    k1, k2, k3, k4 = jax.random.split(key, 4)
    w1 = fanin_init_weight(k1, state_shape, hidden_dim)
    w2 = fanin_init_weight(k2, hidden_dim, hidden_dim)
    w3 = fanin_init_weight(k3, hidden_dim, hidden_dim)
    w4 = fanin_init_weight(k4, hidden_dim, 1)
    b1 = jnp.full((1, hidden_dim), b_init_value, jnp.float32)
    b2 = jnp.full((1, hidden_dim), b_init_value, jnp.float32)
    b3 = jnp.full((1, hidden_dim), b_init_value, jnp.float32)
    b4 = jnp.full((1, 1), b_init_value, jnp.float32)
    return ((w1, b1), (w2, b2), (w3, b3), (w4, b4))


def reference_forward(state, params):
    (w1, b1), (w2, b2), (w3, b3), (w4, b4) = params
    h = jnp.maximum(state @ w1 + b1, 0.0)
    h = jnp.maximum(h @ w2 + b2, 0.0)
    h = jnp.maximum(h @ w3 + b3, 0.0)
    return h @ w4 + b4


# ----------------------------------- main ------------------------------------
if __name__ == "__main__":
    key = jax.random.PRNGKey(0)
    k_state, k_params = jax.random.split(key)

    state_shape = 32    # args.state_shape
    hidden_dim = 32     # args.qtran_hidden_dim
    params = make_params(k_params, state_shape, hidden_dim)

    # Test 1: small batch, packed path (P=4), single tile.
    batch = 16
    state = jax.random.normal(k_state, (batch, state_shape), dtype=jnp.float32)
    v = jax.block_until_ready(qtran_v_forward(state, params))
    v_ref = reference_forward(state, params)
    assert v.shape == (batch, 1)
    np.testing.assert_allclose(np.asarray(v), np.asarray(v_ref),
                               rtol=1e-5, atol=1e-5)

    # Test 2: ragged batch + multi-tile grid (batch_tile=128 -> 5 grid steps,
    # last tile partial; exercises Pallas partial-block handling, no jnp.pad).
    batch2 = 600
    state2 = jax.random.normal(jax.random.PRNGKey(1),
                               (batch2, state_shape), dtype=jnp.float32)
    v2 = jax.block_until_ready(qtran_v_forward(state2, params, batch_tile=128))
    v2_ref = reference_forward(state2, params)
    assert v2.shape == (batch2, 1)
    np.testing.assert_allclose(np.asarray(v2), np.asarray(v2_ref),
                               rtol=1e-5, atol=1e-5)

    # Test 3: batch not divisible by the pack factor -> P=1 fallback path.
    batch3 = 13
    state3 = jax.random.normal(jax.random.PRNGKey(2),
                               (batch3, state_shape), dtype=jnp.float32)
    v3 = jax.block_until_ready(qtran_v_forward(state3, params))
    v3_ref = reference_forward(state3, params)
    assert v3.shape == (batch3, 1)
    np.testing.assert_allclose(np.asarray(v3), np.asarray(v3_ref),
                               rtol=1e-5, atol=1e-5)

    print("KERNEL_OK")
</pallas_src>

<mosaic_0001>
module attributes {stable_mosaic.version = 11 : i64} {
  func.func @qtran_v_kernel(%arg0: i32, %arg1: memref<8x128xf32, #tpu.memory_space<vmem>>, %arg2: memref<128x128xf32, #tpu.memory_space<vmem>>, %arg3: memref<1x128xf32, #tpu.memory_space<vmem>>, %arg4: memref<128x128xf32, #tpu.memory_space<vmem>>, %arg5: memref<1x128xf32, #tpu.memory_space<vmem>>, %arg6: memref<128x128xf32, #tpu.memory_space<vmem>>, %arg7: memref<1x128xf32, #tpu.memory_space<vmem>>, %arg8: memref<128x4xf32, #tpu.memory_space<vmem>>, %arg9: memref<1x1xf32, #tpu.memory_space<smem>>, %arg10: memref<8x4xf32, #tpu.memory_space<vmem>>) attributes {dimension_semantics = [#tpu.dimension_semantics<parallel>], iteration_bounds = array<i64: 1>, scalar_prefetch = 0 : i64, scratch_operands = 0 : i64, tpu.core_type = #tpu.core_type<tc>, window_params = [{transform_indices = @transform_0, window_bounds = array<i64: 8, 128>}, {pipeline_mode = #tpu.pipeline_mode<synchronous>, transform_indices = @transform_1, window_bounds = array<i64: 128, 128>}, {pipeline_mode = #tpu.pipeline_mode<synchronous>, transform_indices = @transform_2, window_bounds = array<i64: 1, 128>}, {pipeline_mode = #tpu.pipeline_mode<synchronous>, transform_indices = @transform_3, window_bounds = array<i64: 128, 128>}, {pipeline_mode = #tpu.pipeline_mode<synchronous>, transform_indices = @transform_4, window_bounds = array<i64: 1, 128>}, {pipeline_mode = #tpu.pipeline_mode<synchronous>, transform_indices = @transform_5, window_bounds = array<i64: 128, 128>}, {pipeline_mode = #tpu.pipeline_mode<synchronous>, transform_indices = @transform_6, window_bounds = array<i64: 1, 128>}, {pipeline_mode = #tpu.pipeline_mode<synchronous>, transform_indices = @transform_7, window_bounds = array<i64: 128, 4>}, {transform_indices = @transform_8, window_bounds = array<i64: 1, 1>}, {transform_indices = @transform_9, window_bounds = array<i64: 8, 4>}]} {
    %c0 = arith.constant 0 : index
    %c0_0 = arith.constant 0 : index
    %0 = vector.load %arg1[%c0, %c0_0] : memref<8x128xf32, #tpu.memory_space<vmem>>, vector<8x128xf32>
    %c0_1 = arith.constant 0 : index
    %c0_2 = arith.constant 0 : index
    %1 = vector.load %arg2[%c0_1, %c0_2] : memref<128x128xf32, #tpu.memory_space<vmem>>, vector<128x128xf32>
    %cst = arith.constant dense<0.000000e+00> : vector<8x128xf32>
    %2 = tpu.matmul %0, %1, %cst {dimension_numbers = #tpu.dot_dimension_numbers<[1], [0], [0], [1], [0, 0, 1, 1], [], []>} : vector<8x128xf32>, vector<128x128xf32>, vector<8x128xf32> -> vector<8x128xf32>
    %c0_3 = arith.constant 0 : index
    %c0_4 = arith.constant 0 : index
    %3 = vector.load %arg3[%c0_3, %c0_4] : memref<1x128xf32, #tpu.memory_space<vmem>>, vector<1x128xf32>
    %4 = vector.broadcast %3 : vector<1x128xf32> to vector<8x128xf32>
    %5 = arith.addf %2, %4 : vector<8x128xf32>
    %cst_5 = arith.constant 0.000000e+00 : f32
    %6 = vector.broadcast %cst_5 : f32 to vector<8x128xf32>
    %7 = arith.maximumf %5, %6 : vector<8x128xf32>
    %c0_6 = arith.constant 0 : index
    %c0_7 = arith.constant 0 : index
    %8 = vector.load %arg4[%c0_6, %c0_7] : memref<128x128xf32, #tpu.memory_space<vmem>>, vector<128x128xf32>
    %cst_8 = arith.constant dense<0.000000e+00> : vector<8x128xf32>
    %9 = tpu.matmul %7, %8, %cst_8 {dimension_numbers = #tpu.dot_dimension_numbers<[1], [0], [0], [1], [0, 0, 1, 1], [], []>} : vector<8x128xf32>, vector<128x128xf32>, vector<8x128xf32> -> vector<8x128xf32>
    %c0_9 = arith.constant 0 : index
    %c0_10 = arith.constant 0 : index
    %10 = vector.load %arg5[%c0_9, %c0_10] : memref<1x128xf32, #tpu.memory_space<vmem>>, vector<1x128xf32>
    %11 = vector.broadcast %10 : vector<1x128xf32> to vector<8x128xf32>
    %12 = arith.addf %9, %11 : vector<8x128xf32>
    %cst_11 = arith.constant 0.000000e+00 : f32
    %13 = vector.broadcast %cst_11 : f32 to vector<8x128xf32>
    %14 = arith.maximumf %12, %13 : vector<8x128xf32>
    %c0_12 = arith.constant 0 : index
    %c0_13 = arith.constant 0 : index
    %15 = vector.load %arg6[%c0_12, %c0_13] : memref<128x128xf32, #tpu.memory_space<vmem>>, vector<128x128xf32>
    %cst_14 = arith.constant dense<0.000000e+00> : vector<8x128xf32>
    %16 = tpu.matmul %14, %15, %cst_14 {dimension_numbers = #tpu.dot_dimension_numbers<[1], [0], [0], [1], [0, 0, 1, 1], [], []>} : vector<8x128xf32>, vector<128x128xf32>, vector<8x128xf32> -> vector<8x128xf32>
    %c0_15 = arith.constant 0 : index
    %c0_16 = arith.constant 0 : index
    %17 = vector.load %arg7[%c0_15, %c0_16] : memref<1x128xf32, #tpu.memory_space<vmem>>, vector<1x128xf32>
    %18 = vector.broadcast %17 : vector<1x128xf32> to vector<8x128xf32>
    %19 = arith.addf %16, %18 : vector<8x128xf32>
    %cst_17 = arith.constant 0.000000e+00 : f32
    %20 = vector.broadcast %cst_17 : f32 to vector<8x128xf32>
    %21 = arith.maximumf %19, %20 : vector<8x128xf32>
    %c0_18 = arith.constant 0 : index
    %c0_19 = arith.constant 0 : index
    %22 = vector.load %arg8[%c0_18, %c0_19] : memref<128x4xf32, #tpu.memory_space<vmem>>, vector<128x4xf32>
    %cst_20 = arith.constant dense<0.000000e+00> : vector<8x4xf32>
    %23 = tpu.matmul %21, %22, %cst_20 {dimension_numbers = #tpu.dot_dimension_numbers<[1], [0], [0], [1], [0, 0, 1, 1], [], []>} : vector<8x128xf32>, vector<128x4xf32>, vector<8x4xf32> -> vector<8x4xf32>
    %c0_21 = arith.constant 0 : index
    %c0_22 = arith.constant 0 : index
    %24 = memref.load %arg9[%c0_21, %c0_22] : memref<1x1xf32, #tpu.memory_space<smem>>
    %25 = vector.broadcast %24 : f32 to vector<8x4xf32>
    %26 = arith.addf %23, %25 : vector<8x4xf32>
    %c0_23 = arith.constant 0 : index
    %c0_24 = arith.constant 0 : index
    %27 = vector.load %arg10[%c0_23, %c0_24] : memref<8x4xf32, #tpu.memory_space<vmem>>, vector<8x4xf32>
    tpu.vector_store %arg10[%c0_23, %c0_24], %26 {strides = array<i32>} : memref<8x4xf32, #tpu.memory_space<vmem>>, vector<8x4xf32>,
    return
  }
  func.func @transform_0(%arg0: i32) -> (i32, i32) {
    %c0_i32 = arith.constant 0 : i32
    %c0_i32_0 = arith.constant 0 : i32
    return %arg0, %c0_i32 : i32, i32
  }
  func.func @transform_1(%arg0: i32) -> (i32, i32) {
    %c0_i32 = arith.constant 0 : i32
    %c0_i32_0 = arith.constant 0 : i32
    %c0_i32_1 = arith.constant 0 : i32
    return %c0_i32, %c0_i32_0 : i32, i32
  }
  func.func @transform_2(%arg0: i32) -> (i32, i32) {
    %c0_i32 = arith.constant 0 : i32
    %c0_i32_0 = arith.constant 0 : i32
    %c0_i32_1 = arith.constant 0 : i32
    return %c0_i32, %c0_i32_0 : i32, i32
  }
  func.func @transform_3(%arg0: i32) -> (i32, i32) {
    %c0_i32 = arith.constant 0 : i32
    %c0_i32_0 = arith.constant 0 : i32
    %c0_i32_1 = arith.constant 0 : i32
    return %c0_i32, %c0_i32_0 : i32, i32
  }
  func.func @transform_4(%arg0: i32) -> (i32, i32) {
    %c0_i32 = arith.constant 0 : i32
    %c0_i32_0 = arith.constant 0 : i32
    %c0_i32_1 = arith.constant 0 : i32
    return %c0_i32, %c0_i32_0 : i32, i32
  }
  func.func @transform_5(%arg0: i32) -> (i32, i32) {
    %c0_i32 = arith.constant 0 : i32
    %c0_i32_0 = arith.constant 0 : i32
    %c0_i32_1 = arith.constant 0 : i32
    return %c0_i32, %c0_i32_0 : i32, i32
  }
  func.func @transform_6(%arg0: i32) -> (i32, i32) {
    %c0_i32 = arith.constant 0 : i32
    %c0_i32_0 = arith.constant 0 : i32
    %c0_i32_1 = arith.constant 0 : i32
    return %c0_i32, %c0_i32_0 : i32, i32
  }
  func.func @transform_7(%arg0: i32) -> (i32, i32) {
    %c0_i32 = arith.constant 0 : i32
    %c0_i32_0 = arith.constant 0 : i32
    %c0_i32_1 = arith.constant 0 : i32
    return %c0_i32, %c0_i32_0 : i32, i32
  }
  func.func @transform_8(%arg0: i32) -> (i32, i32) {
    %c0_i32 = arith.constant 0 : i32
    %c0_i32_0 = arith.constant 0 : i32
    %c0_i32_1 = arith.constant 0 : i32
    return %c0_i32, %c0_i32_0 : i32, i32
  }
  func.func @transform_9(%arg0: i32) -> (i32, i32) {
    %c0_i32 = arith.constant 0 : i32
    %c0_i32_0 = arith.constant 0 : i32
    return %arg0, %c0_i32 : i32, i32
  }
}

</mosaic_0001>

<llo_original>
// kernel: tpu_custom_call.1
$region0: #{tpu_custom_call.1}
  #allocation0 [shape = 'u32[]', space=smem, size = 0x4, offset = 0x4, fixed_abs, tag = 'smem constant byte address 0x4 - core index']
  #allocation1 [shape = 'u32[72,128]{1,0:T(1,128)}', space=vmem, size = 0x9000, scoped, tag = 'internal scratch']
  #allocation2 [shape = 'f32[1,1]{1,0:T(1,128)S(6)}', space=smem, size = 0x200, scoped, tag = 'scoped memory for tpu_custom_call.1']
  %s0 = inlined_call_operand.vmem [shape: f32[4,128], index: 0, kind: input, shape index: {}]
  %s1 = inlined_call_operand.vmem [shape: f32[128,128], index: 1, kind: input, shape index: {}]
  %s2 = inlined_call_operand.vmem [shape: f32[1,128], index: 2, kind: input, shape index: {}]
  %s3 = inlined_call_operand.hbm [shape: f32[128,128], index: 3, kind: input, shape index: {}]
  %s4 = inlined_call_operand.vmem [shape: f32[1,128], index: 4, kind: input, shape index: {}]
  %s5 = inlined_call_operand.hbm [shape: f32[128,128], index: 5, kind: input, shape index: {}]
  %s6 = inlined_call_operand.vmem [shape: f32[1,128], index: 6, kind: input, shape index: {}]
  %s7 = inlined_call_operand.vmem [shape: f32[128,4], index: 7, kind: input, shape index: {}]
  %s8 = inlined_call_operand.<no memory space> [shape: f32[1,1], index: 8, kind: input, shape index: {}]
  %s9 = inlined_call_operand.vmem [shape: f32[8,4], index: 9, kind: output, shape index: {}]
  %s10 = sld [smem:[#allocation0]]
  $region54: #{tpu_custom_call.1} parent=0
    _
  %s12 = ssub.s32 1, %s10
  %s13 = scalar_select 0, %s12, %s10
  %14 = sst [smem:[#allocation2]] %s8
  $region1: #{tpu_custom_call.1} parent=0
    #allocation3 [shape = 'u8[65536]{0}', space=vmem, size = 0x10000, scoped, tag = 'input window, operand 3, single buffered']
    #allocation4 [shape = 's32[1]{0}', space=sflag, size = 0x4, scoped, tag = 'scoped memory for tpu_custom_call.1']
    #allocation5 [shape = 'u8[65536]{0}', space=vmem, size = 0x10000, scoped, tag = 'input window, operand 5, single buffered']
    #allocation6 [shape = 's32[1]{0}', space=sflag, size = 0x4, scoped, tag = 'scoped memory for tpu_custom_call.1']
    %15 = vsyncpa [#allocation4], 0
    %16 = vsyncpa [#allocation6], 0
    // Predicated region
    $region2: #{tpu_custom_call.1} parent=1 // pred_check
      _
    $region3: #{tpu_custom_call.1} parent=1 // pred_check_branch
      %18 = sbr.rel (0) target = $region5
    $region4: #{tpu_custom_call.1} parent=1 // pred_region
      _
    $region5: #{tpu_custom_call.1} parent=1 // pred_fallthru
      _
    // Predicated region
    $region6: #{tpu_custom_call.1} parent=1 // pred_check
      _
    $region7: #{tpu_custom_call.1} parent=1 // pred_check_branch
      %20 = sbr.rel (0) target = $region9
    $region8: #{tpu_custom_call.1} parent=1 // pred_region
      _
    $region9: #{tpu_custom_call.1} parent=1 // pred_fallthru
      _
    // Predicated region
    $region10: #{tpu_custom_call.1} parent=1 // pred_check
      _
    $region11: #{tpu_custom_call.1} parent=1 // pred_check_branch
      %22 = sbr.rel (0) target = $region13
    $region12: #{tpu_custom_call.1} parent=1 // pred_region
      _
    $region13: #{tpu_custom_call.1} parent=1 // pred_fallthru
      _
    // Predicated region
    $region14: #{tpu_custom_call.1} parent=1 // pred_check
      _
    $region15: #{tpu_custom_call.1} parent=1 // pred_check_branch
      %24 = sbr.rel (0) target = $region17
    $region16: #{tpu_custom_call.1} parent=1 // pred_region
      %26 = vsyncadd [#allocation4], 0
      %s27 = sshll.u32 %s3, 4
      %s28 = int_to_ptr.hbm [resolvable:$true] %s27
      %s29 = sshll.u32 [#allocation3], 4
      %s30 = int_to_ptr.vmem [resolvable:$true] %s29
      %35 = dma.hbm_to_vmem [thread:$0]  %s28, 2048, %s30, [#allocation4], 128, 128, 8
    $region17: #{tpu_custom_call.1} parent=1 // pred_fallthru
      _
    // Predicated region
    $region18: #{tpu_custom_call.1} parent=1 // pred_check
      _
    $region19: #{tpu_custom_call.1} parent=1 // pred_check_branch
      %37 = sbr.rel (0) target = $region21
    $region20: #{tpu_custom_call.1} parent=1 // pred_region
      _
    $region21: #{tpu_custom_call.1} parent=1 // pred_fallthru
      _
    // Predicated region
    $region22: #{tpu_custom_call.1} parent=1 // pred_check
      _
    $region23: #{tpu_custom_call.1} parent=1 // pred_check_branch
      %39 = sbr.rel (0) target = $region25
    $region24: #{tpu_custom_call.1} parent=1 // pred_region
      %41 = vsyncadd [#allocation6], 0
      %s42 = sshll.u32 %s5, 4
      %s43 = int_to_ptr.hbm [resolvable:$true] %s42
      %s44 = sshll.u32 [#allocation5], 4
      %s45 = int_to_ptr.vmem [resolvable:$true] %s44
      %50 = dma.hbm_to_vmem [thread:$0]  %s43, 2048, %s45, [#allocation6], 128, 128, 8
    $region25: #{tpu_custom_call.1} parent=1 // pred_fallthru
      _
    // Predicated region
    $region26: #{tpu_custom_call.1} parent=1 // pred_check
      _
    $region27: #{tpu_custom_call.1} parent=1 // pred_check_branch
      %52 = sbr.rel (0) target = $region29
    $region28: #{tpu_custom_call.1} parent=1 // pred_region
      _
    $region29: #{tpu_custom_call.1} parent=1 // pred_fallthru
      _
    // Predicated region
    $region30: #{tpu_custom_call.1} parent=1 // pred_check
      _
    $region31: #{tpu_custom_call.1} parent=1 // pred_check_branch
      %54 = sbr.rel (0) target = $region33
    $region32: #{tpu_custom_call.1} parent=1 // pred_region
      _
    $region33: #{tpu_custom_call.1} parent=1 // pred_fallthru
      _
    // Predicated region
    $region34: #{tpu_custom_call.1} parent=1 // pred_check
      _
    $region35: #{tpu_custom_call.1} parent=1 // pred_check_branch
      %56 = sbr.rel (0) target = $region37
    $region36: #{tpu_custom_call.1} parent=1 // pred_region
      _
    $region37: #{tpu_custom_call.1} parent=1 // pred_fallthru
      _
    // Predicated region
    $region38: #{tpu_custom_call.1} parent=1 // pred_check
      _
    $region39: #{tpu_custom_call.1} parent=1 // pred_check_branch
      %58 = sbr.rel (0) target = $region41
    $region40: #{tpu_custom_call.1} parent=1 // pred_region
      %60 = dma.done [#allocation4], 2048
    $region41: #{tpu_custom_call.1} parent=1 // pred_fallthru
      _
    // Predicated region
    $region42: #{tpu_custom_call.1} parent=1 // pred_check
      _
    $region43: #{tpu_custom_call.1} parent=1 // pred_check_branch
      %62 = sbr.rel (0) target = $region45
    $region44: #{tpu_custom_call.1} parent=1 // pred_region
      %64 = dma.done [#allocation6], 2048
    $region45: #{tpu_custom_call.1} parent=1 // pred_fallthru
      _
    %v65 = vld [vmem:[%s0] sm:$0xff]
    %v66 = vld [vmem:[%s1] sm:$0xff]
    %v67 = vld [vmem:[%s1 + $0x8] sm:$0xff]
    %v68 = vld [vmem:[%s1 + $0x10] sm:$0xff]
    %v69 = vld [vmem:[%s1 + $0x18] sm:$0xff]
    %v70 = vld [vmem:[%s1 + $0x20] sm:$0xff]
    %v71 = vld [vmem:[%s1 + $0x28] sm:$0xff]
    %v72 = vld [vmem:[%s1 + $0x30] sm:$0xff]
    %v73 = vld [vmem:[%s1 + $0x38] sm:$0xff]
    %v74 = vld [vmem:[%s1 + $0x40] sm:$0xff]
    %v75 = vld [vmem:[%s1 + $0x48] sm:$0xff]
    %v76 = vld [vmem:[%s1 + $0x50] sm:$0xff]
    %v77 = vld [vmem:[%s1 + $0x58] sm:$0xff]
    %v78 = vld [vmem:[%s1 + $0x60] sm:$0xff]
    %v79 = vld [vmem:[%s1 + $0x68] sm:$0xff]
    %v80 = vld [vmem:[%s1 + $0x70] sm:$0xff]
    %v81 = vld [vmem:[%s1 + $0x78] sm:$0xff]
    %v82 = vld [vmem:[%s2] sm:$0x1]
    %v84 = vperm.slane %v82, 0
    %86 = vmatpush.msra.mxu0 %v81
    %87 = vmatpush.msra.mxu0 %v80
    %88 = vmatpush.msra.mxu0 %v79
    %89 = vmatpush.msra.mxu0 %v78
    %90 = vmatpush.msra.mxu0 %v77
    %91 = vmatpush.msra.mxu0 %v76
    %92 = vmatpush.msra.mxu0 %v75
    %93 = vmatpush.msra.mxu0 %v74
    %94 = vmatpush.msra.mxu0 %v73
    %95 = vmatpush.msra.mxu0 %v72
    %96 = vmatpush.msra.mxu0 %v71
    %97 = vmatpush.msra.mxu0 %v70
    %98 = vmatpush.msra.mxu0 %v69
    %99 = vmatpush.msra.mxu0 %v68
    %100 = vmatpush.msra.mxu0 %v67
    %101 = vmatpush.msra.mxu0 %v66
    %102 = vmatmul.f32.gmra.mxu0 %v65
    %v103 = vpop.f32.mrf.mxu0
    %v104 = vadd.f32 %v84, %v103
    %105 = vdwg.mxu0
    %v106 = vmax.f32 %v104, 0.0
    %v107 = vld [vmem:[#allocation3] sm:$0xff]
    %v108 = vld [vmem:[#allocation3 + $0x8] sm:$0xff]
    %v109 = vld [vmem:[#allocation3 + $0x10] sm:$0xff]
    %v110 = vld [vmem:[#allocation3 + $0x18] sm:$0xff]
    %v111 = vld [vmem:[#allocation3 + $0x20] sm:$0xff]
    %v112 = vld [vmem:[#allocation3 + $0x28] sm:$0xff]
    %v113 = vld [vmem:[#allocation3 + $0x30] sm:$0xff]
    %v114 = vld [vmem:[#allocation3 + $0x38] sm:$0xff]
    %v115 = vld [vmem:[#allocation3 + $0x40] sm:$0xff]
    %v116 = vld [vmem:[#allocation3 + $0x48] sm:$0xff]
    %v117 = vld [vmem:[#allocation3 + $0x50] sm:$0xff]
    %v118 = vld [vmem:[#allocation3 + $0x58] sm:$0xff]
    %v119 = vld [vmem:[#allocation3 + $0x60] sm:$0xff]
    %v120 = vld [vmem:[#allocation3 + $0x68] sm:$0xff]
    %v121 = vld [vmem:[#allocation3 + $0x70] sm:$0xff]
    %v122 = vld [vmem:[#allocation3 + $0x78] sm:$0xff]
    %v123 = vld [vmem:[%s4] sm:$0x1]
    %v125 = vperm.slane %v123, 0
    %127 = vmatpush.msra.mxu0 %v122
    %128 = vmatpush.msra.mxu0 %v121
    %129 = vmatpush.msra.mxu0 %v120
    %130 = vmatpush.msra.mxu0 %v119
    %131 = vmatpush.msra.mxu0 %v118
    %132 = vmatpush.msra.mxu0 %v117
    %133 = vmatpush.msra.mxu0 %v116
    %134 = vmatpush.msra.mxu0 %v115
    %135 = vmatpush.msra.mxu0 %v114
    %136 = vmatpush.msra.mxu0 %v113
    %137 = vmatpush.msra.mxu0 %v112
    %138 = vmatpush.msra.mxu0 %v111
    %139 = vmatpush.msra.mxu0 %v110
    %140 = vmatpush.msra.mxu0 %v109
    %141 = vmatpush.msra.mxu0 %v108
    %142 = vmatpush.msra.mxu0 %v107
    %143 = vmatmul.f32.gmra.mxu0 %v106
    %v144 = vpop.f32.mrf.mxu0
    %v145 = vadd.f32 %v125, %v144
    %146 = vdwg.mxu0
    %v147 = vmax.f32 %v145, 0.0
    %v148 = vld [vmem:[#allocation5] sm:$0xff]
    %v149 = vld [vmem:[#allocation5 + $0x8] sm:$0xff]
    %v150 = vld [vmem:[#allocation5 + $0x10] sm:$0xff]
    %v151 = vld [vmem:[#allocation5 + $0x18] sm:$0xff]
    %v152 = vld [vmem:[#allocation5 + $0x20] sm:$0xff]
    %v153 = vld [vmem:[#allocation5 + $0x28] sm:$0xff]
    %v154 = vld [vmem:[#allocation5 + $0x30] sm:$0xff]
    %v155 = vld [vmem:[#allocation5 + $0x38] sm:$0xff]
    %v156 = vld [vmem:[#allocation5 + $0x40] sm:$0xff]
    %v157 = vld [vmem:[#allocation5 + $0x48] sm:$0xff]
    %v158 = vld [vmem:[#allocation5 + $0x50] sm:$0xff]
    %v159 = vld [vmem:[#allocation5 + $0x58] sm:$0xff]
    %v160 = vld [vmem:[#allocation5 + $0x60] sm:$0xff]
    %v161 = vld [vmem:[#allocation5 + $0x68] sm:$0xff]
    %v162 = vld [vmem:[#allocation5 + $0x70] sm:$0xff]
    %v163 = vld [vmem:[#allocation5 + $0x78] sm:$0xff]
    %v164 = vld [vmem:[%s6] sm:$0x1]
    %v166 = vperm.slane %v164, 0
    %168 = vmatpush.msra.mxu0 %v163
    %169 = vmatpush.msra.mxu0 %v162
    %170 = vmatpush.msra.mxu0 %v161
    %171 = vmatpush.msra.mxu0 %v160
    %172 = vmatpush.msra.mxu0 %v159
    %173 = vmatpush.msra.mxu0 %v158
    %174 = vmatpush.msra.mxu0 %v157
    %175 = vmatpush.msra.mxu0 %v156
    %176 = vmatpush.msra.mxu0 %v155
    %177 = vmatpush.msra.mxu0 %v154
    %178 = vmatpush.msra.mxu0 %v153
    %179 = vmatpush.msra.mxu0 %v152
    %180 = vmatpush.msra.mxu0 %v151
    %181 = vmatpush.msra.mxu0 %v150
    %182 = vmatpush.msra.mxu0 %v149
    %183 = vmatpush.msra.mxu0 %v148
    %184 = vmatmul.f32.gmra.mxu0 %v147
    %v185 = vpop.f32.mrf.mxu0
    %v186 = vadd.f32 %v166, %v185
    %187 = vdwg.mxu0
    %v188 = vmax.f32 %v186, 0.0
    %v189 = vld [vmem:[%s7] sm:$0xff]
    %v190 = vld [vmem:[%s7 + $0x8] sm:$0xff]
    %v191 = vld [vmem:[%s7 + $0x10] sm:$0xff]
    %v192 = vld [vmem:[%s7 + $0x18] sm:$0xff]
    %v193 = vld [vmem:[%s7 + $0x20] sm:$0xff]
    %v194 = vld [vmem:[%s7 + $0x28] sm:$0xff]
    %v195 = vld [vmem:[%s7 + $0x30] sm:$0xff]
    %v196 = vld [vmem:[%s7 + $0x38] sm:$0xff]
    %v197 = vld [vmem:[%s7 + $0x40] sm:$0xff]
    %v198 = vld [vmem:[%s7 + $0x48] sm:$0xff]
    %v199 = vld [vmem:[%s7 + $0x50] sm:$0xff]
    %v200 = vld [vmem:[%s7 + $0x58] sm:$0xff]
    %v201 = vld [vmem:[%s7 + $0x60] sm:$0xff]
    %v202 = vld [vmem:[%s7 + $0x68] sm:$0xff]
    %v203 = vld [vmem:[%s7 + $0x70] sm:$0xff]
    %v204 = vld [vmem:[%s7 + $0x78] sm:$0xff]
    %s205 = sld [smem:[#allocation2]]
    %v206 = vstv %s205
    %207 = vmatpush.msra.mxu0 %v204
    %208 = vmatpush.msra.mxu0 %v203
    %209 = vmatpush.msra.mxu0 %v202
    %210 = vmatpush.msra.mxu0 %v201
    %211 = vmatpush.msra.mxu0 %v200
    %212 = vmatpush.msra.mxu0 %v199
    %213 = vmatpush.msra.mxu0 %v198
    %214 = vmatpush.msra.mxu0 %v197
    %215 = vmatpush.msra.mxu0 %v196
    %216 = vmatpush.msra.mxu0 %v195
    %217 = vmatpush.msra.mxu0 %v194
    %218 = vmatpush.msra.mxu0 %v193
    %219 = vmatpush.msra.mxu0 %v192
    %220 = vmatpush.msra.mxu0 %v191
    %221 = vmatpush.msra.mxu0 %v190
    %222 = vmatpush.msra.mxu0 %v189
    %223 = vmatmul.f32.gmra.mxu0 %v188
    %v224 = vpop.f32.mrf.mxu0
    %v225 = vadd.f32 %v206, %v224
    %226 = vdwg.mxu0
    %vm227 = vcmask 31744
    %228 = vst.msk [vmem:[%s9] sm:$0xff] %vm227, %v225
    // Predicated region
    $region46: #{tpu_custom_call.1} parent=1 // pred_check
      _
    $region47: #{tpu_custom_call.1} parent=1 // pred_check_branch
      %230 = sbr.rel (0) target = $region49
    $region48: #{tpu_custom_call.1} parent=1 // pred_region
      _
    $region49: #{tpu_custom_call.1} parent=1 // pred_fallthru
      _
    // Predicated region
    $region50: #{tpu_custom_call.1} parent=1 // pred_check
      _
    $region51: #{tpu_custom_call.1} parent=1 // pred_check_branch
      %232 = sbr.rel (0) target = $region53
    $region52: #{tpu_custom_call.1} parent=1 // pred_region
      _
    $region53: #{tpu_custom_call.1} parent=1 // pred_fallthru
      _
    %233 = vsyncpa [#allocation4], 1
    %234 = vsyncpa [#allocation6], 1

</llo_original>
